<compile_context>
chip_gen: v7x
topology: tpu7x:2x2x1
jax: 0.10.0
libtpu: 0.0.40
codegen_flags: <defaults>
</compile_context>

<pallas_src>
import functools

import jax
import jax.numpy as jnp
from jax import lax
from jax.experimental import pallas as pl
from jax.experimental.pallas import tpu as pltpu

_LANES = 128


# --------------------------------------------------------------------------- #
# Kernel: lane-dense broadcast add of the upsampled intensity shift.
# --------------------------------------------------------------------------- #
def _add_shift_kernel(up_ref, x_ref, o_ref):
    # up_ref: (1, HWp) resident f32 shift row; x_ref / o_ref: (BR, HWp) block.
    # Accumulate in f32 (free on the VPU -- the kernel is HBM-bound), cast on
    # store so the output dtype matches the batch dtype.
    o_ref[...] = (x_ref[...].astype(jnp.float32) + up_ref[...]).astype(o_ref.dtype)


# --------------------------------------------------------------------------- #
# Host-side helpers (one-shot, tiny work: canvas is (H/16, W/16)).
# --------------------------------------------------------------------------- #
def _interp_matrix(out_size: int, in_size: int) -> jnp.ndarray:
    """Row-interpolation matrix M (out, in) for 1-D linear interpolation with
    align_corners=True:  out = M @ in."""
    if in_size == 1:
        return jnp.ones((out_size, 1), jnp.float32)
    src = jnp.arange(out_size, dtype=jnp.float32) * (in_size - 1) / (out_size - 1)
    i0 = jnp.clip(jnp.floor(src).astype(jnp.int32), 0, in_size - 2)
    frac = src - i0.astype(jnp.float32)
    m = jnp.zeros((out_size, in_size), jnp.float32)
    rows = jnp.arange(out_size)
    m = m.at[rows, i0].add(1.0 - frac)
    m = m.at[rows, i0 + 1].add(frac)
    return m


@functools.lru_cache(maxsize=1)
def _tpu_tuning():
    """Per-generation block-size / VMEM tuning (queried once at trace time)."""
    try:
        kind = jax.devices()[0].device_kind.lower()
    except Exception:  # pragma: no cover - defensive
        kind = ""
    if ("v5" in kind) or ("v6" in kind):
        # v5e / v6e: 128 MiB VMEM, single TensorCore -> large blocks amortize
        # the ~0.35 us per-step overhead against HBM bandwidth.
        return {"target_bytes": 8 << 20, "vmem_limit": 64 << 20, "min_steps": 1}
    # v7x (and unknown): 64 MiB VMEM per TensorCore, 2 TCs per chip -> smaller
    # blocks, modest VMEM request, and >=2 grid steps so the "parallel" axis
    # can be sharded across both cores instead of leaving one idle.
    return {"target_bytes": 5 << 20, "vmem_limit": 40 << 20, "min_steps": 2}


def _pick_block_rows(nc: int, row_bytes: int, sub: int,
                     target_bytes: int, min_steps: int) -> int:
    """Rows per block: as large as the per-block byte budget allows, rounded
    to the dtype's sublane-packing multiple, preferring a divisor of `nc`
    (no masked tail block) and keeping >= `min_steps` grid steps when the
    batch is big enough to split."""
    budget = max(sub, (target_bytes // max(1, row_bytes)) // sub * sub)
    if min_steps > 1 and nc >= min_steps * sub:
        budget = min(budget, max(sub, (nc // min_steps) // sub * sub))
    if budget >= nc:
        return nc
    # Prefer a divisor of nc, but never shrink the block by more than ~2x.
    br = budget
    while br >= max(sub, budget // 2):
        if nc % br == 0:
            return br
        br -= sub
    return budget


# --------------------------------------------------------------------------- #
# Forward pass.
# --------------------------------------------------------------------------- #
@functools.partial(jax.jit, static_argnames=("downsize",), donate_argnums=(0,))
def random_intensity_shift(batch, mu, std, intensity, downsize=16):
    N, C, H, W = batch.shape
    h, w = H // downsize, W // downsize
    NC, HW = N * C, H * W

    # ---- one-shot canvas build (literal module semantics: the Gaussians are
    # evaluated on the accumulated canvas values, exactly as the PyTorch
    # forward does) + bilinear align_corners=True upsample to (H, W).
    def body(f, canvas):
        dist = jnp.exp(-((canvas - mu[f, 0]) ** 2 / std[f, 0]
                         + (canvas - mu[f, 1]) ** 2 / std[f, 1]))
        dist = dist / jnp.max(dist)
        return canvas + intensity[f] * dist

    canvas = lax.fori_loop(0, mu.shape[0], body,
                           jnp.zeros((h, w), jnp.float32))
    up = _interp_matrix(H, h) @ canvas @ _interp_matrix(W, w).T        # (H, W) f32
    up_row = up.reshape(1, HW)                                         # keep f32

    # ---- hot path: lane-dense broadcast add over fused (n, c) slabs.
    x2d = batch.reshape(NC, HW)

    # Keep every store a full 128-lane vst (no-op when HW % 128 == 0).
    HWp = pl.cdiv(HW, _LANES) * _LANES
    if HWp != HW:
        x2d = jnp.pad(x2d, ((0, 0), (0, HWp - HW)))
        up_row = jnp.pad(up_row, ((0, 0), (0, HWp - HW)))

    tune = _tpu_tuning()
    sub = max(8, 32 // jnp.dtype(batch.dtype).itemsize)   # sublane packing multiple
    br = _pick_block_rows(NC, HWp * x2d.dtype.itemsize, sub,
                          tune["target_bytes"], tune["min_steps"])

    out2d = pl.pallas_call(
        _add_shift_kernel,
        out_shape=jax.ShapeDtypeStruct((NC, HWp), batch.dtype),
        grid=(pl.cdiv(NC, br),),
        in_specs=[
            pl.BlockSpec((1, HWp), lambda i: (0, 0)),     # resident shift row (fetched once)
            pl.BlockSpec((br, HWp), lambda i: (i, 0)),    # batch block
        ],
        out_specs=pl.BlockSpec((br, HWp), lambda i: (i, 0)),
        input_output_aliases={1: 0},                      # in-place over donated batch
        compiler_params=pltpu.CompilerParams(
            dimension_semantics=("parallel",),            # megacore-shard on v7x
            vmem_limit_bytes=tune["vmem_limit"]),
    )(up_row, x2d)

    if HWp != HW:
        out2d = out2d[:, :HW]
    return out2d.reshape(N, C, H, W)


# --------------------------------------------------------------------------- #
# Pure-JAX reference (literal PyTorch forward semantics).
# --------------------------------------------------------------------------- #
def _reference(batch, mu, std, intensity, downsize):
    N, C, H, W = batch.shape
    h, w = H // downsize, W // downsize
    canvas = jnp.zeros((h, w), jnp.float32)
    for f in range(mu.shape[0]):
        dist = jnp.exp(-((canvas - mu[f, 0]) ** 2 / std[f, 0]
                         + (canvas - mu[f, 1]) ** 2 / std[f, 1]))
        dist = dist / jnp.max(dist)
        canvas = canvas + intensity[f] * dist
    up = _interp_matrix(H, h) @ canvas @ _interp_matrix(W, w).T
    return (batch + up[None, None]).astype(batch.dtype)


if __name__ == "__main__":
    # Module hyper-parameters (deterministic, in-script).
    intensity_change_std = 0.1
    size_std = 8.0
    filter_count = 3
    downsize = 16
    size_std_internal = size_std / downsize

    # Small input consistent with the module: N=2, C=4, H=W=64 -> canvas 4x4.
    N, C, H, W = 2, 4, 64, 64
    h, w = H // downsize, W // downsize

    key = jax.random.PRNGKey(0)
    k_x, k_mu, k_std, k_ic = jax.random.split(key, 4)

    batch = jax.random.normal(k_x, (N, C, H, W), dtype=jnp.float32)

    # Per-filter random draws (the module's torch.rand / torch.normal calls),
    # done host-side with jax.random instead of in-kernel RNG.
    mu = jax.random.uniform(k_mu, (filter_count, 2), dtype=jnp.float32) \
         * jnp.array([h, w], dtype=jnp.float32)
    std = jnp.abs(size_std_internal
                  + (size_std_internal / 2.0)
                  * jax.random.normal(k_std, (filter_count, 2), dtype=jnp.float32))
    intensity = intensity_change_std \
        * jax.random.normal(k_ic, (filter_count,), dtype=jnp.float32)

    # Compute the pure-JAX reference BEFORE the kernel call: `batch` is donated
    # at the jit boundary so the in-place alias can be honored with no copy.
    ref = jax.block_until_ready(_reference(batch, mu, std, intensity, downsize))

    out = random_intensity_shift(batch, mu, std, intensity, downsize=downsize)
    out = jax.block_until_ready(out)

    assert out.shape == (N, C, H, W) and out.dtype == jnp.float32
    assert jnp.allclose(out, ref, atol=1e-5, rtol=1e-5), "mismatch vs reference"

    print("KERNEL_OK")
</pallas_src>

<mosaic_0001>
module attributes {stable_mosaic.version = 11 : i64} {
  func.func private @main(%arg0: i32) attributes {dimension_semantics = [#tpu.dimension_semantics<core_parallel>], iteration_bounds = array<i64: 2>, tpu.core_type = #tpu.core_type<sc_scalar_subcore>, window_params = []} {
    return
  }
}

module attributes {stable_mosaic.version = 11 : i64} {
  func.func private @main(%arg0: i32) attributes {dimension_semantics = [#tpu.dimension_semantics<core_parallel>], iteration_bounds = array<i64: 2>, tpu.core_type = #tpu.core_type<sc_scalar_subcore>, window_params = []} {
    return
  }
}

module attributes {stable_mosaic.version = 11 : i64} {
  func.func @_add_shift_kernel(%arg0: i32, %arg1: memref<1x4096xf32, #tpu.memory_space<vmem>>, %arg2: memref<8x4096xf32, #tpu.memory_space<vmem>>, %arg3: memref<8x4096xf32, #tpu.memory_space<vmem>>) attributes {dimension_semantics = [#tpu.dimension_semantics<parallel>], iteration_bounds = array<i64: 1>, scalar_prefetch = 0 : i64, scratch_operands = 0 : i64, tpu.core_type = #tpu.core_type<tc>, window_params = [{pipeline_mode = #tpu.pipeline_mode<synchronous>, transform_indices = @transform_0, window_bounds = array<i64: 1, 4096>}, {transform_indices = @transform_1, window_bounds = array<i64: 8, 4096>}, {transform_indices = @transform_2, window_bounds = array<i64: 8, 4096>}]} {
    %c0 = arith.constant 0 : index
    %c0_0 = arith.constant 0 : index
    %0 = vector.load %arg2[%c0, %c0_0] : memref<8x4096xf32, #tpu.memory_space<vmem>>, vector<8x4096xf32>
    %c0_1 = arith.constant 0 : index
    %c0_2 = arith.constant 0 : index
    %1 = vector.load %arg1[%c0_1, %c0_2] : memref<1x4096xf32, #tpu.memory_space<vmem>>, vector<1x4096xf32>
    %2 = vector.broadcast %1 : vector<1x4096xf32> to vector<8x4096xf32>
    %3 = arith.addf %0, %2 : vector<8x4096xf32>
    %c0_3 = arith.constant 0 : index
    %c0_4 = arith.constant 0 : index
    %4 = vector.load %arg3[%c0_3, %c0_4] : memref<8x4096xf32, #tpu.memory_space<vmem>>, vector<8x4096xf32>
    tpu.vector_store %arg3[%c0_3, %c0_4], %3 {strides = array<i32>} : memref<8x4096xf32, #tpu.memory_space<vmem>>, vector<8x4096xf32>,
    return
  }
  func.func @transform_0(%arg0: i32) -> (i32, i32) {
    %c0_i32 = arith.constant 0 : i32
    %c0_i32_0 = arith.constant 0 : i32
    %c0_i32_1 = arith.constant 0 : i32
    return %c0_i32, %c0_i32_0 : i32, i32
  }
  func.func @transform_1(%arg0: i32) -> (i32, i32) {
    %c0_i32 = arith.constant 0 : i32
    %c0_i32_0 = arith.constant 0 : i32
    return %arg0, %c0_i32 : i32, i32
  }
  func.func @transform_2(%arg0: i32) -> (i32, i32) {
    %c0_i32 = arith.constant 0 : i32
    %c0_i32_0 = arith.constant 0 : i32
    return %arg0, %c0_i32 : i32, i32
  }
}

</mosaic_0001>

<llo_original>
// kernel: custom-call.4
$region0: #{custom-call.4}
  %s0 = inlined_call_operand.vmem [shape: f32[4,4], index: 0, kind: output, shape index: {}]

// kernel: random_intensity_shift.1
$region0: #{random_intensity_shift.1}
  #allocation0 [shape = 'u32[]', space=smem, size = 0x4, offset = 0x4, fixed_abs, tag = 'smem constant byte address 0x4 - core index']
  #allocation1 [shape = 'u32[144,128]{1,0:T(1,128)}', space=vmem, size = 0x12000, scoped, tag = 'internal scratch']
  %s0 = inlined_call_operand.vmem [shape: f32[1,4096], index: 0, kind: input, shape index: {}]
  %s1 = inlined_call_operand.vmem [shape: f32[8,4096], index: 1, kind: input, shape index: {}, may-alias: {1,2}]
  %s2 = inlined_call_operand.vmem [shape: f32[8,4096], index: 2, kind: output, shape index: {}, may-alias: {1,2}]
  %s3 = sld [smem:[#allocation0]]
  $region18: #{random_intensity_shift.1} parent=0
    _
  %s5 = ssub.s32 1, %s3
  %s6 = scalar_select 0, %s5, %s3
  // Predicated region
  $region2: #{random_intensity_shift.1} parent=0 // pred_check
    _
  $region3: #{random_intensity_shift.1} parent=0 // pred_check_branch
    %8 = sbr.rel (0) target = $region5
  $region4: #{random_intensity_shift.1} parent=0 // pred_region
    _
  $region5: #{random_intensity_shift.1} parent=0 // pred_fallthru
    _
  // Predicated region
  $region6: #{random_intensity_shift.1} parent=0 // pred_check
    _
  $region7: #{random_intensity_shift.1} parent=0 // pred_check_branch
    %10 = sbr.rel (0) target = $region9
  $region8: #{random_intensity_shift.1} parent=0 // pred_region
    _
  $region9: #{random_intensity_shift.1} parent=0 // pred_fallthru
    _
  %v11 = vld [vmem:[%s1] sm:$0xff]
  %v12 = vld [vmem:[%s1 + $0x8] sm:$0xff]
  %v13 = vld [vmem:[%s1 + $0x10] sm:$0xff]
  %v14 = vld [vmem:[%s1 + $0x18] sm:$0xff]
  %v15 = vld [vmem:[%s1 + $0x20] sm:$0xff]
  %v16 = vld [vmem:[%s1 + $0x28] sm:$0xff]
  %v17 = vld [vmem:[%s1 + $0x30] sm:$0xff]
  %v18 = vld [vmem:[%s1 + $0x38] sm:$0xff]
  %v19 = vld [vmem:[%s1 + $0x40] sm:$0xff]
  %v20 = vld [vmem:[%s1 + $0x48] sm:$0xff]
  %v21 = vld [vmem:[%s1 + $0x50] sm:$0xff]
  %v22 = vld [vmem:[%s1 + $0x58] sm:$0xff]
  %v23 = vld [vmem:[%s1 + $0x60] sm:$0xff]
  %v24 = vld [vmem:[%s1 + $0x68] sm:$0xff]
  %v25 = vld [vmem:[%s1 + $0x70] sm:$0xff]
  %v26 = vld [vmem:[%s1 + $0x78] sm:$0xff]
  %v27 = vld [vmem:[%s1 + $0x80] sm:$0xff]
  %v28 = vld [vmem:[%s1 + $0x88] sm:$0xff]
  %v29 = vld [vmem:[%s1 + $0x90] sm:$0xff]
  %v30 = vld [vmem:[%s1 + $0x98] sm:$0xff]
  %v31 = vld [vmem:[%s1 + $0xa0] sm:$0xff]
  %v32 = vld [vmem:[%s1 + $0xa8] sm:$0xff]
  %v33 = vld [vmem:[%s1 + $0xb0] sm:$0xff]
  %v34 = vld [vmem:[%s1 + $0xb8] sm:$0xff]
  %v35 = vld [vmem:[%s1 + $0xc0] sm:$0xff]
  %v36 = vld [vmem:[%s1 + $0xc8] sm:$0xff]
  %v37 = vld [vmem:[%s1 + $0xd0] sm:$0xff]
  %v38 = vld [vmem:[%s1 + $0xd8] sm:$0xff]
  %v39 = vld [vmem:[%s1 + $0xe0] sm:$0xff]
  %v40 = vld [vmem:[%s1 + $0xe8] sm:$0xff]
  %v41 = vld [vmem:[%s1 + $0xf0] sm:$0xff]
  %v42 = vld [vmem:[%s1 + $0xf8] sm:$0xff]
  %v43 = vld [vmem:[%s0] sm:$0xff]
  %v44 = vld [vmem:[%s0 + $0x8] sm:$0xff]
  %v45 = vld [vmem:[%s0 + $0x10] sm:$0xff]
  %v46 = vld [vmem:[%s0 + $0x18] sm:$0xff]
  %v51 = vlaneseq
  %v52 = vshrl.u32 %v51, 7
  %v53 = vsub.s32 0, %v52
  %v54 = vrot.slane %v43, %v53
  %v55 = vlaneseq
  %v56 = vshrl.u32 %v55, 7
  %v57 = vsub.s32 1, %v56
  %v58 = vrot.slane %v43, %v57
  %v59 = vlaneseq
  %v60 = vshrl.u32 %v59, 7
  %v61 = vsub.s32 2, %v60
  %v62 = vrot.slane %v43, %v61
  %v63 = vlaneseq
  %v64 = vshrl.u32 %v63, 7
  %v65 = vsub.s32 3, %v64
  %v66 = vrot.slane %v43, %v65
  %v67 = vlaneseq
  %v68 = vshrl.u32 %v67, 7
  %v69 = vsub.s32 4, %v68
  %v70 = vrot.slane %v43, %v69
  %v71 = vlaneseq
  %v72 = vshrl.u32 %v71, 7
  %v73 = vsub.s32 5, %v72
  %v74 = vrot.slane %v43, %v73
  %v75 = vlaneseq
  %v76 = vshrl.u32 %v75, 7
  %v77 = vsub.s32 6, %v76
  %v78 = vrot.slane %v43, %v77
  %v79 = vlaneseq
  %v80 = vshrl.u32 %v79, 7
  %v81 = vsub.s32 7, %v80
  %v82 = vrot.slane %v43, %v81
  %v83 = vlaneseq
  %v84 = vshrl.u32 %v83, 7
  %v85 = vsub.s32 0, %v84
  %v86 = vrot.slane %v44, %v85
  %v87 = vlaneseq
  %v88 = vshrl.u32 %v87, 7
  %v89 = vsub.s32 1, %v88
  %v90 = vrot.slane %v44, %v89
  %v91 = vlaneseq
  %v92 = vshrl.u32 %v91, 7
  %v93 = vsub.s32 2, %v92
  %v94 = vrot.slane %v44, %v93
  %v95 = vlaneseq
  %v96 = vshrl.u32 %v95, 7
  %v97 = vsub.s32 3, %v96
  %v98 = vrot.slane %v44, %v97
  %v99 = vlaneseq
  %v100 = vshrl.u32 %v99, 7
  %v101 = vsub.s32 4, %v100
  %v102 = vrot.slane %v44, %v101
  %v103 = vlaneseq
  %v104 = vshrl.u32 %v103, 7
  %v105 = vsub.s32 5, %v104
  %v106 = vrot.slane %v44, %v105
  %v107 = vlaneseq
  %v108 = vshrl.u32 %v107, 7
  %v109 = vsub.s32 6, %v108
  %v110 = vrot.slane %v44, %v109
  %v111 = vlaneseq
  %v112 = vshrl.u32 %v111, 7
  %v113 = vsub.s32 7, %v112
  %v114 = vrot.slane %v44, %v113
  %v115 = vlaneseq
  %v116 = vshrl.u32 %v115, 7
  %v117 = vsub.s32 0, %v116
  %v118 = vrot.slane %v45, %v117
  %v119 = vlaneseq
  %v120 = vshrl.u32 %v119, 7
  %v121 = vsub.s32 1, %v120
  %v122 = vrot.slane %v45, %v121
  %v123 = vlaneseq
  %v124 = vshrl.u32 %v123, 7
  %v125 = vsub.s32 2, %v124
  %v126 = vrot.slane %v45, %v125
  %v127 = vlaneseq
  %v128 = vshrl.u32 %v127, 7
  %v129 = vsub.s32 3, %v128
  %v130 = vrot.slane %v45, %v129
  %v131 = vlaneseq
  %v132 = vshrl.u32 %v131, 7
  %v133 = vsub.s32 4, %v132
  %v134 = vrot.slane %v45, %v133
  %v135 = vlaneseq
  %v136 = vshrl.u32 %v135, 7
  %v137 = vsub.s32 5, %v136
  %v138 = vrot.slane %v45, %v137
  %v139 = vlaneseq
  %v140 = vshrl.u32 %v139, 7
  %v141 = vsub.s32 6, %v140
  %v142 = vrot.slane %v45, %v141
  %v143 = vlaneseq
  %v144 = vshrl.u32 %v143, 7
  %v145 = vsub.s32 7, %v144
  %v146 = vrot.slane %v45, %v145
  %v147 = vlaneseq
  %v148 = vshrl.u32 %v147, 7
  %v149 = vsub.s32 0, %v148
  %v150 = vrot.slane %v46, %v149
  %v151 = vlaneseq
  %v152 = vshrl.u32 %v151, 7
  %v153 = vsub.s32 1, %v152
  %v154 = vrot.slane %v46, %v153
  %v155 = vlaneseq
  %v156 = vshrl.u32 %v155, 7
  %v157 = vsub.s32 2, %v156
  %v158 = vrot.slane %v46, %v157
  %v159 = vlaneseq
  %v160 = vshrl.u32 %v159, 7
  %v161 = vsub.s32 3, %v160
  %v162 = vrot.slane %v46, %v161
  %v163 = vlaneseq
  %v164 = vshrl.u32 %v163, 7
  %v165 = vsub.s32 4, %v164
  %v166 = vrot.slane %v46, %v165
  %v167 = vlaneseq
  %v168 = vshrl.u32 %v167, 7
  %v169 = vsub.s32 5, %v168
  %v170 = vrot.slane %v46, %v169
  %v171 = vlaneseq
  %v172 = vshrl.u32 %v171, 7
  %v173 = vsub.s32 6, %v172
  %v174 = vrot.slane %v46, %v173
  %v175 = vlaneseq
  %v176 = vshrl.u32 %v175, 7
  %v177 = vsub.s32 7, %v176
  %v178 = vrot.slane %v46, %v177
  %v211 = vadd.f32 %v11, %v54
  %v212 = vadd.f32 %v12, %v58
  %v213 = vadd.f32 %v13, %v62
  %v214 = vadd.f32 %v14, %v66
  %v215 = vadd.f32 %v15, %v70
  %v216 = vadd.f32 %v16, %v74
  %v217 = vadd.f32 %v17, %v78
  %v218 = vadd.f32 %v18, %v82
  %v219 = vadd.f32 %v19, %v86
  %v220 = vadd.f32 %v20, %v90
  %v221 = vadd.f32 %v21, %v94
  %v222 = vadd.f32 %v22, %v98
  %v223 = vadd.f32 %v23, %v102
  %v224 = vadd.f32 %v24, %v106
  %v225 = vadd.f32 %v25, %v110
  %v226 = vadd.f32 %v26, %v114
  %v227 = vadd.f32 %v27, %v118
  %v228 = vadd.f32 %v28, %v122
  %v229 = vadd.f32 %v29, %v126
  %v230 = vadd.f32 %v30, %v130
  %v231 = vadd.f32 %v31, %v134
  %v232 = vadd.f32 %v32, %v138
  %v233 = vadd.f32 %v33, %v142
  %v234 = vadd.f32 %v34, %v146
  %v235 = vadd.f32 %v35, %v150
  %v236 = vadd.f32 %v36, %v154
  %v237 = vadd.f32 %v37, %v158
  %v238 = vadd.f32 %v38, %v162
  %v239 = vadd.f32 %v39, %v166
  %v240 = vadd.f32 %v40, %v170
  %v241 = vadd.f32 %v41, %v174
  %v242 = vadd.f32 %v42, %v178
  %243 = vst [vmem:[%s2] sm:$0xff] %v211
  %244 = vst [vmem:[%s2 + $0x8] sm:$0xff] %v212
  %245 = vst [vmem:[%s2 + $0x10] sm:$0xff] %v213
  %246 = vst [vmem:[%s2 + $0x18] sm:$0xff] %v214
  %247 = vst [vmem:[%s2 + $0x20] sm:$0xff] %v215
  %248 = vst [vmem:[%s2 + $0x28] sm:$0xff] %v216
  %249 = vst [vmem:[%s2 + $0x30] sm:$0xff] %v217
  %250 = vst [vmem:[%s2 + $0x38] sm:$0xff] %v218
  %251 = vst [vmem:[%s2 + $0x40] sm:$0xff] %v219
  %252 = vst [vmem:[%s2 + $0x48] sm:$0xff] %v220
  %253 = vst [vmem:[%s2 + $0x50] sm:$0xff] %v221
  %254 = vst [vmem:[%s2 + $0x58] sm:$0xff] %v222
  %255 = vst [vmem:[%s2 + $0x60] sm:$0xff] %v223
  %256 = vst [vmem:[%s2 + $0x68] sm:$0xff] %v224
  %257 = vst [vmem:[%s2 + $0x70] sm:$0xff] %v225
  %258 = vst [vmem:[%s2 + $0x78] sm:$0xff] %v226
  %259 = vst [vmem:[%s2 + $0x80] sm:$0xff] %v227
  %260 = vst [vmem:[%s2 + $0x88] sm:$0xff] %v228
  %261 = vst [vmem:[%s2 + $0x90] sm:$0xff] %v229
  %262 = vst [vmem:[%s2 + $0x98] sm:$0xff] %v230
  %263 = vst [vmem:[%s2 + $0xa0] sm:$0xff] %v231
  %264 = vst [vmem:[%s2 + $0xa8] sm:$0xff] %v232
  %265 = vst [vmem:[%s2 + $0xb0] sm:$0xff] %v233
  %266 = vst [vmem:[%s2 + $0xb8] sm:$0xff] %v234
  %267 = vst [vmem:[%s2 + $0xc0] sm:$0xff] %v235
  %268 = vst [vmem:[%s2 + $0xc8] sm:$0xff] %v236
  %269 = vst [vmem:[%s2 + $0xd0] sm:$0xff] %v237
  %270 = vst [vmem:[%s2 + $0xd8] sm:$0xff] %v238
  %271 = vst [vmem:[%s2 + $0xe0] sm:$0xff] %v239
  %272 = vst [vmem:[%s2 + $0xe8] sm:$0xff] %v240
  %273 = vst [vmem:[%s2 + $0xf0] sm:$0xff] %v241
  %274 = vst [vmem:[%s2 + $0xf8] sm:$0xff] %v242
  // Predicated region
  $region10: #{random_intensity_shift.1} parent=0 // pred_check
    _
  $region11: #{random_intensity_shift.1} parent=0 // pred_check_branch
    %276 = sbr.rel (0) target = $region13
  $region12: #{random_intensity_shift.1} parent=0 // pred_region
    _
  $region13: #{random_intensity_shift.1} parent=0 // pred_fallthru
    _
  // Predicated region
  $region14: #{random_intensity_shift.1} parent=0 // pred_check
    _
  $region15: #{random_intensity_shift.1} parent=0 // pred_check_branch
    %278 = sbr.rel (0) target = $region17
  $region16: #{random_intensity_shift.1} parent=0 // pred_region
    _
  $region17: #{random_intensity_shift.1} parent=0 // pred_fallthru
    _

</llo_original>
